<compile_context>
chip_gen: v7x
topology: tpu7x:2x2x1
jax: 0.10.0
libtpu: 0.0.40
codegen_flags: <defaults>
</compile_context>

<pallas_src>
import functools

import jax
import jax.numpy as jnp
from jax.experimental import pallas as pl
from jax.experimental.pallas import tpu as pltpu

LANES = 128
# Byte budget per block (not a fixed row count) so bf16/int8 inputs get
# proportionally more rows per block.  4 MiB/block -> ~16 MiB resident with
# in+out double buffering.
DEFAULT_BLOCK_BYTES = 4 * 1024 * 1024


def _sq_relu_kernel(x_ref, o_ref):
    x = x_ref[...]
    r = jnp.maximum(x, jnp.zeros_like(x))  # ReLU on the VPU
    o_ref[...] = r * r                     # square


def _rows_per_block(dtype, block_bytes):
    """Rows of a [rows, 128] slab that fit the per-block byte budget (mult of 8)."""
    itemsize = jnp.dtype(dtype).itemsize
    rows = max(8, block_bytes // (LANES * itemsize))
    return (rows // 8) * 8  # keep sublane-aligned


def _sq_relu_2d(x2d, block_bytes):
    """Run the Pallas kernel on a lane-dense [rows, 128] slab."""
    rows, lanes = x2d.shape
    tile = min(_rows_per_block(x2d.dtype, block_bytes), rows)
    grid = (pl.cdiv(rows, tile),)

    itemsize = jnp.dtype(x2d.dtype).itemsize
    cost = pl.CostEstimate(
        flops=2 * rows * lanes,
        transcendentals=0,
        bytes_accessed=2 * rows * lanes * itemsize,
    )

    return pl.pallas_call(
        _sq_relu_kernel,
        out_shape=jax.ShapeDtypeStruct((rows, lanes), x2d.dtype),
        grid_spec=pltpu.PrefetchScalarGridSpec(
            num_scalar_prefetch=0,
            grid=grid,
            in_specs=[pl.BlockSpec((tile, lanes), lambda i: (i, 0))],
            out_specs=pl.BlockSpec((tile, lanes), lambda i: (i, 0)),
        ),
        compiler_params=pltpu.CompilerParams(
            # NOTE: on v7x, if profiling shows only one TensorCore active,
            # switch this axis to pltpu.CORE_PARALLEL (grid has >=2 blocks for
            # any input larger than one block).
            dimension_semantics=("parallel",),
            vmem_limit_bytes=32 * 1024 * 1024,  # required on v5e once tile > 4 MiB
        ),
        cost_estimate=cost,
    )(x2d)


@functools.partial(jax.jit, static_argnames=("block_bytes",))
def squared_relu(x: jax.Array, *, block_bytes: int = DEFAULT_BLOCK_BYTES) -> jax.Array:
    """Elementwise relu(x)**2 (same semantics as torch.pow(torch.relu(x), 2))."""
    orig_shape = x.shape
    n = x.size
    if n == 0:
        return x

    flat = x.reshape(-1)          # metadata-only for contiguous inputs
    rem = n % LANES
    main = n - rem

    if main == 0:
        # Tiny input (< 128 elements): not worth a kernel launch.
        return jnp.square(jnp.maximum(flat, jnp.zeros_like(flat))).reshape(orig_shape)

    if rem == 0:
        # Common, 128-aligned path: pure metadata reshape, no pad/slice copies.
        out2d = _sq_relu_2d(flat.reshape(n // LANES, LANES), block_bytes)
        return out2d.reshape(orig_shape)

    # Misaligned path: run the kernel on the 128-aligned prefix and compute the
    # <128-element tail in plain JAX (cheaper than padding + slicing the whole
    # tensor, which costs two extra full HBM passes).
    main_out = _sq_relu_2d(flat[:main].reshape(main // LANES, LANES), block_bytes)
    tail = flat[main:]
    tail_out = jnp.square(jnp.maximum(tail, jnp.zeros_like(tail)))
    return jnp.concatenate([main_out.reshape(-1), tail_out]).reshape(orig_shape)


if __name__ == "__main__":
    key = jax.random.PRNGKey(0)
    # Small NCHW-like activation tensor (batch=2, channels=4, H=W=16).
    x = jax.random.normal(key, (2, 4, 16, 16), dtype=jnp.float32)

    y = squared_relu(x)
    y = jax.block_until_ready(y)

    # Reference check against plain JAX (same semantics as torch.pow(relu(x), 2)).
    y_ref = jnp.square(jnp.maximum(x, 0.0))
    assert y.shape == x.shape and y.dtype == x.dtype
    assert jnp.allclose(y, y_ref, atol=1e-6, rtol=1e-6)

    # Also exercise a non-128-aligned size to cover the tail path.
    x2 = jax.random.normal(jax.random.PRNGKey(1), (5, 7, 11), dtype=jnp.float32)
    y2 = jax.block_until_ready(squared_relu(x2))
    assert jnp.allclose(y2, jnp.square(jnp.maximum(x2, 0.0)), atol=1e-6, rtol=1e-6)

    print("KERNEL_OK")
</pallas_src>

<mosaic_0001>
module attributes {stable_mosaic.version = 11 : i64} {
  func.func @_sq_relu_kernel(%arg0: i32, %arg1: memref<16x128xf32, #tpu.memory_space<vmem>>, %arg2: memref<16x128xf32, #tpu.memory_space<vmem>>) attributes {dimension_semantics = [#tpu.dimension_semantics<parallel>], iteration_bounds = array<i64: 1>, scalar_prefetch = 0 : i64, scratch_operands = 0 : i64, tpu.core_type = #tpu.core_type<tc>, window_params = [{transform_indices = @transform_0, window_bounds = array<i64: 16, 128>}, {transform_indices = @transform_1, window_bounds = array<i64: 16, 128>}]} {
    %c0 = arith.constant 0 : index
    %c0_0 = arith.constant 0 : index
    %0 = vector.load %arg1[%c0, %c0_0] : memref<16x128xf32, #tpu.memory_space<vmem>>, vector<16x128xf32>
    %cst = arith.constant 0.000000e+00 : f32
    %1 = vector.broadcast %cst : f32 to vector<16x128xf32>
    %2 = arith.maximumf %0, %1 : vector<16x128xf32>
    %3 = arith.mulf %2, %2 : vector<16x128xf32>
    %c0_1 = arith.constant 0 : index
    %c0_2 = arith.constant 0 : index
    %4 = vector.load %arg2[%c0_1, %c0_2] : memref<16x128xf32, #tpu.memory_space<vmem>>, vector<16x128xf32>
    tpu.vector_store %arg2[%c0_1, %c0_2], %3 {strides = array<i32>} : memref<16x128xf32, #tpu.memory_space<vmem>>, vector<16x128xf32>,
    return
  }
  func.func @transform_0(%arg0: i32) -> (i32, i32) {
    %c0_i32 = arith.constant 0 : i32
    %c0_i32_0 = arith.constant 0 : i32
    return %arg0, %c0_i32 : i32, i32
  }
  func.func @transform_1(%arg0: i32) -> (i32, i32) {
    %c0_i32 = arith.constant 0 : i32
    %c0_i32_0 = arith.constant 0 : i32
    return %arg0, %c0_i32 : i32, i32
  }
}

</mosaic_0001>

<llo_original>
// kernel: squared_relu.1
$region0: #{squared_relu.1}
  #allocation0 [shape = 'u32[]', space=smem, size = 0x4, offset = 0x4, fixed_abs, tag = 'smem constant byte address 0x4 - core index']
  #allocation1 [shape = 'u32[144,128]{1,0:T(1,128)}', space=vmem, size = 0x12000, scoped, tag = 'internal scratch']
  %s0 = inlined_call_operand.vmem [shape: f32[16,128], index: 0, kind: input, shape index: {}]
  %s1 = inlined_call_operand.vmem [shape: f32[16,128], index: 1, kind: output, shape index: {}]
  %s2 = sld [smem:[#allocation0]]
  $region14: #{squared_relu.1} parent=0
    _
  %s4 = ssub.s32 1, %s2
  %s5 = scalar_select 0, %s4, %s2
  // Predicated region
  $region2: #{squared_relu.1} parent=0 // pred_check
    _
  $region3: #{squared_relu.1} parent=0 // pred_check_branch
    %7 = sbr.rel (0) target = $region5
  $region4: #{squared_relu.1} parent=0 // pred_region
    _
  $region5: #{squared_relu.1} parent=0 // pred_fallthru
    _
  %v8 = vld [vmem:[%s0] sm:$0xff]
  %v9 = vld [vmem:[%s0 + $0x8] sm:$0xff]
  %v10 = vmax.f32 %v8, 0.0
  %v11 = vmax.f32 %v9, 0.0
  %v12 = vmul.f32 %v10, %v10
  %v13 = vmul.f32 %v11, %v11
  %14 = vst [vmem:[%s1] sm:$0xff] %v12
  %15 = vst [vmem:[%s1 + $0x8] sm:$0xff] %v13
  // Predicated region
  $region6: #{squared_relu.1} parent=0 // pred_check
    _
  $region7: #{squared_relu.1} parent=0 // pred_check_branch
    %17 = sbr.rel (0) target = $region9
  $region8: #{squared_relu.1} parent=0 // pred_region
    _
  $region9: #{squared_relu.1} parent=0 // pred_fallthru
    _
  // Predicated region
  $region10: #{squared_relu.1} parent=0 // pred_check
    _
  $region11: #{squared_relu.1} parent=0 // pred_check_branch
    %19 = sbr.rel (0) target = $region13
  $region12: #{squared_relu.1} parent=0 // pred_region
    _
  $region13: #{squared_relu.1} parent=0 // pred_fallthru
    _

</llo_original>
